<compile_context>
chip_gen: v7x
topology: tpu7x:2x2x1
jax: 0.10.0
libtpu: 0.0.40
codegen_flags: <defaults>
</compile_context>

<pallas_src>
import functools
import math

import jax
import jax.numpy as jnp
from jax import lax
from jax.experimental import pallas as pl
from jax.experimental.pallas import tpu as pltpu


def _round_up(n: int, m: int) -> int:
    return ((n + m - 1) // m) * m


def _pick_tile(n: int, tile_max: int, granularity: int) -> int:
    """Pick a tile size (multiple of `granularity`) limiting padding overhead."""
    n_eff = max(n, granularity)
    tile = min(tile_max, _round_up(n_eff, granularity))
    min_pad = _round_up(n_eff, granularity)
    # Shrink the tile while the padded extent would exceed ~12.5% overhead
    # (avoids writing large swaths of padded output just to discard them).
    while tile > granularity and _round_up(n_eff, tile) > min_pad * 1.125:
        tile //= 2
    return max(tile, granularity)


# ---------------------------------------------------------------------------
# Stage 1: projection + centering + row normalization (runs once per row block).
# ---------------------------------------------------------------------------
def _project_center_normalize_kernel(x_ref, w_ref, o_ref, *, inv_k, eps):
    xp = jnp.dot(x_ref[...], w_ref[...], preferred_element_type=jnp.float32)
    # mean over the *actual* kernel_dim (sum * 1/K), safe under row padding.
    xp = xp - jnp.sum(xp, axis=1, keepdims=True) * inv_k
    # Pre-normalize rows: rsqrt(sumsq + tiny) keeps zero (padded) rows exactly 0.
    r = lax.rsqrt(jnp.sum(xp * xp, axis=1, keepdims=True) + eps)
    o_ref[...] = xp * r


def _project_center_normalize(x, w_t, *, row_tile):
    n, e = x.shape
    k = w_t.shape[1]
    n_pad = _round_up(max(n, 8), row_tile)
    if n_pad != n:
        x = jnp.pad(x, ((0, n_pad - n), (0, 0)))
    kernel = functools.partial(
        _project_center_normalize_kernel, inv_k=1.0 / float(k), eps=1e-12)
    out = pl.pallas_call(
        kernel,
        out_shape=jax.ShapeDtypeStruct((n_pad, k), jnp.float32),
        grid=(n_pad // row_tile,),
        in_specs=[
            pl.BlockSpec((row_tile, e), lambda i: (i, 0)),
            pl.BlockSpec((e, k), lambda i: (0, 0)),
        ],
        out_specs=pl.BlockSpec((row_tile, k), lambda i: (i, 0)),
        compiler_params=pltpu.CompilerParams(dimension_semantics=("parallel",)),
    )(x, w_t)
    return out


# ---------------------------------------------------------------------------
# Stage 2: tiled correlation + scaled-sigmoid epilogue (tanh form).
# ---------------------------------------------------------------------------
def _corr_tile_kernel(xpn_ref, ypnT_ref, o_ref, *, half_alpha, coeff):
    # Rows are pre-normalized, so the matmul IS the correlation.
    corr = jnp.dot(xpn_ref[...], ypnT_ref[...],
                   preferred_element_type=jnp.float32)
    corr = jnp.clip(corr, -1.0, 1.0)  # matches corr[corr>1]=1 / corr[corr<-1]=-1
    # sigmoid(a*c) rescaled to [0,1]  ==  0.5 + 0.5*inv_range * tanh(a*c/2)
    out = 0.5 + coeff * jnp.tanh(half_alpha * corr)
    o_ref[...] = out.astype(o_ref.dtype)


def linear_corr_decoder(x, y, wx_t, wy_t, alpha, *, tm=512, tn=2048,
                        out_dtype=jnp.float32):
    """x: [Nx, E], y: [Ny, E], wx_t/wy_t: [E, K] (nn.Linear weight transposed).

    out_dtype=jnp.bfloat16 halves HBM writeback on v5e/v6e (math stays f32,
    cast only at the store); default f32 matches the PyTorch module exactly.
    """
    nx, ex = x.shape
    ny, ey = y.shape
    assert ex == ey, "Different size!"
    k = wx_t.shape[1]
    assert wy_t.shape[1] == k

    alpha = float(alpha)
    if alpha == 0.0:
        # Original module is also degenerate here (0/0 in the rescaling).
        raise ValueError("alpha == 0 is degenerate in LinearCorrDecoder.")

    tm = _pick_tile(nx, tm, 8)      # sublane granularity
    tn = _pick_tile(ny, tn, 128)    # lane-dense output tiles

    # Hoisted per-row work (tiny: E=embed_dim, K=kernel_dim).
    xpn = _project_center_normalize(x, wx_t, row_tile=tm)   # [Nx_pad, K]
    ypn = _project_center_normalize(y, wy_t, row_tile=tn)   # [Ny_pad, K]
    # One tiny transpose (Ny*K elements) -> lane-dense RHS for the hot loop.
    ypn_t = ypn.T                                            # [K, Ny_pad]

    nx_pad, ny_pad = xpn.shape[0], ypn.shape[0]
    gi, gj = nx_pad // tm, ny_pad // tn

    max_v = 1.0 / (1.0 + math.exp(-alpha))   # sigmoid(alpha)
    min_v = 1.0 / (1.0 + math.exp(alpha))    # sigmoid(-alpha)
    inv_range = 1.0 / (max_v - min_v)
    coeff = 0.5 * inv_range                  # (0.5 - min_v)*inv_range == 0.5 exactly
    half_alpha = 0.5 * alpha

    kernel = functools.partial(
        _corr_tile_kernel, half_alpha=half_alpha, coeff=coeff)

    out_itemsize = jnp.dtype(out_dtype).itemsize
    cost = pl.CostEstimate(
        flops=2 * nx_pad * ny_pad * k,
        transcendentals=nx_pad * ny_pad,                     # 1 tanh / element
        bytes_accessed=(4 * (nx_pad * k + gi * ny_pad * k)   # yp re-read per i-pass
                        + nx_pad * ny_pad * out_itemsize),
    )

    out = pl.pallas_call(
        kernel,
        out_shape=jax.ShapeDtypeStruct((nx_pad, ny_pad), out_dtype),
        grid=(gi, gj),
        in_specs=[
            pl.BlockSpec((tm, k), lambda i, j: (i, 0)),   # xpn rows, per i
            pl.BlockSpec((k, tn), lambda i, j: (0, j)),   # ypn^T (lane-dense), per j
        ],
        out_specs=pl.BlockSpec((tm, tn), lambda i, j: (i, j)),
        compiler_params=pltpu.CompilerParams(
            dimension_semantics=("parallel", "parallel")),  # megacore on v7x
        cost_estimate=cost,
    )(xpn, ypn_t)

    # Only pay for a slice copy when padding actually happened; aligned Nx/Ny
    # return the kernel output directly (no extra HBM round trip).
    if nx_pad != nx or ny_pad != ny:
        out = out[:nx, :ny]
    return out


def _reference(x, y, wx_t, wy_t, alpha):
    xp = x @ wx_t
    yp = y @ wy_t
    xp = xp - xp.mean(axis=1, keepdims=True)
    yp = yp - yp.mean(axis=1, keepdims=True)
    lxy = xp @ yp.T
    lxx = jnp.diag(xp @ xp.T)
    lyy = jnp.diag(yp @ yp.T)
    std = jnp.sqrt(lxx)[:, None] * jnp.sqrt(lyy)[None, :]
    corr = jnp.clip(lxy / (std + 1e-6), -1.0, 1.0)
    s = jax.nn.sigmoid(alpha * corr)
    return (s - jax.nn.sigmoid(-alpha)) / (jax.nn.sigmoid(alpha) - jax.nn.sigmoid(-alpha))


if __name__ == "__main__":
    embed_dim, kernel_dim = 32, 16
    nx, ny = 12, 20          # intentionally non-multiples to exercise padding
    alpha = 2.0

    key = jax.random.PRNGKey(0)
    kx, ky, kwx, kwy = jax.random.split(key, 4)
    x = jax.random.normal(kx, (nx, embed_dim), dtype=jnp.float32)
    y = jax.random.normal(ky, (ny, embed_dim), dtype=jnp.float32)
    # nn.Linear weights have shape [kernel_dim, embed_dim]; store transposed.
    wx = jax.random.normal(kwx, (kernel_dim, embed_dim), dtype=jnp.float32) * 0.1
    wy = jax.random.normal(kwy, (kernel_dim, embed_dim), dtype=jnp.float32) * 0.1
    wx_t, wy_t = wx.T, wy.T

    out = linear_corr_decoder(x, y, wx_t, wy_t, alpha)
    out = jax.block_until_ready(out)

    ref = _reference(x, y, wx_t, wy_t, alpha)
    assert out.shape == (nx, ny)
    # Pre-normalization uses rsqrt(sumsq + 1e-12) vs the module's /(std + 1e-6);
    # corr is clipped so the difference is bounded well inside tolerance.
    assert jnp.allclose(out, ref, atol=2e-3, rtol=2e-3)
    print("KERNEL_OK")
</pallas_src>

<mosaic_0001>
module attributes {stable_mosaic.version = 11 : i64} {
  func.func @_project_center_normalize_kernel(%arg0: i32, %arg1: memref<16x32xf32, #tpu.memory_space<vmem>>, %arg2: memref<32x16xf32, #tpu.memory_space<vmem>>, %arg3: memref<16x16xf32, #tpu.memory_space<vmem>>) attributes {dimension_semantics = [#tpu.dimension_semantics<parallel>], iteration_bounds = array<i64: 1>, scalar_prefetch = 0 : i64, scratch_operands = 0 : i64, tpu.core_type = #tpu.core_type<tc>, window_params = [{transform_indices = @transform_0, window_bounds = array<i64: 16, 32>}, {pipeline_mode = #tpu.pipeline_mode<synchronous>, transform_indices = @transform_1, window_bounds = array<i64: 32, 16>}, {transform_indices = @transform_2, window_bounds = array<i64: 16, 16>}]} {
    %c0 = arith.constant 0 : index
    %c0_0 = arith.constant 0 : index
    %0 = vector.load %arg1[%c0, %c0_0] : memref<16x32xf32, #tpu.memory_space<vmem>>, vector<16x32xf32>
    %c0_1 = arith.constant 0 : index
    %c0_2 = arith.constant 0 : index
    %1 = vector.load %arg2[%c0_1, %c0_2] : memref<32x16xf32, #tpu.memory_space<vmem>>, vector<32x16xf32>
    %cst = arith.constant dense<0.000000e+00> : vector<16x16xf32>
    %2 = tpu.matmul %0, %1, %cst {dimension_numbers = #tpu.dot_dimension_numbers<[1], [0], [0], [1], [0, 0, 1, 1], [], []>} : vector<16x32xf32>, vector<32x16xf32>, vector<16x16xf32> -> vector<16x16xf32>
    %cst_3 = arith.constant dense<0.000000e+00> : vector<16xf32>
    %3 = vector.multi_reduction <add>, %2, %cst_3 [1] : vector<16x16xf32> to vector<16xf32>
    %4 = vector.shape_cast %3 : vector<16xf32> to vector<16x1xf32>
    %cst_4 = arith.constant 6.250000e-02 : f32
    %5 = vector.broadcast %cst_4 : f32 to vector<16x1xf32>
    %6 = arith.mulf %4, %5 : vector<16x1xf32>
    %7 = vector.broadcast %6 : vector<16x1xf32> to vector<16x16xf32>
    %8 = arith.subf %2, %7 : vector<16x16xf32>
    %9 = arith.mulf %8, %8 : vector<16x16xf32>
    %cst_5 = arith.constant dense<0.000000e+00> : vector<16xf32>
    %10 = vector.multi_reduction <add>, %9, %cst_5 [1] : vector<16x16xf32> to vector<16xf32>
    %11 = vector.shape_cast %10 : vector<16xf32> to vector<16x1xf32>
    %cst_6 = arith.constant 9.99999996E-13 : f32
    %12 = vector.broadcast %cst_6 : f32 to vector<16x1xf32>
    %13 = arith.addf %11, %12 : vector<16x1xf32>
    %14 = math.rsqrt %13 : vector<16x1xf32>
    %15 = vector.broadcast %14 : vector<16x1xf32> to vector<16x16xf32>
    %16 = arith.mulf %8, %15 : vector<16x16xf32>
    %c0_7 = arith.constant 0 : index
    %c0_8 = arith.constant 0 : index
    %17 = vector.load %arg3[%c0_7, %c0_8] : memref<16x16xf32, #tpu.memory_space<vmem>>, vector<16x16xf32>
    tpu.vector_store %arg3[%c0_7, %c0_8], %16 {strides = array<i32>} : memref<16x16xf32, #tpu.memory_space<vmem>>, vector<16x16xf32>,
    return
  }
  func.func @transform_0(%arg0: i32) -> (i32, i32) {
    %c0_i32 = arith.constant 0 : i32
    %c0_i32_0 = arith.constant 0 : i32
    return %arg0, %c0_i32 : i32, i32
  }
  func.func @transform_1(%arg0: i32) -> (i32, i32) {
    %c0_i32 = arith.constant 0 : i32
    %c0_i32_0 = arith.constant 0 : i32
    %c0_i32_1 = arith.constant 0 : i32
    return %c0_i32, %c0_i32_0 : i32, i32
  }
  func.func @transform_2(%arg0: i32) -> (i32, i32) {
    %c0_i32 = arith.constant 0 : i32
    %c0_i32_0 = arith.constant 0 : i32
    return %arg0, %c0_i32 : i32, i32
  }
}

</mosaic_0001>

<llo_original>
// kernel: tpu_custom_call.1
$region0: #{tpu_custom_call.1}
  #allocation0 [shape = 'u32[]', space=smem, size = 0x4, offset = 0x4, fixed_abs, tag = 'smem constant byte address 0x4 - core index']
  #allocation1 [shape = 'u32[144,128]{1,0:T(1,128)}', space=vmem, size = 0x12000, scoped, tag = 'internal scratch']
  %s0 = inlined_call_operand.vmem [shape: f32[16,32], index: 0, kind: input, shape index: {}]
  %s1 = inlined_call_operand.vmem [shape: f32[32,16], index: 1, kind: input, shape index: {}]
  %s2 = inlined_call_operand.hbm [shape: f32[16,16], index: 2, kind: output, shape index: {}]
  %s3 = sld [smem:[#allocation0]]
  $region18: #{tpu_custom_call.1} parent=0
    _
  %s5 = ssub.s32 1, %s3
  %s6 = scalar_select 0, %s5, %s3
  $region1: #{tpu_custom_call.1} parent=0
    #allocation2 [shape = 'u8[8192]{0}', space=vmem, size = 0x2000, scoped, tag = 'output window, operand 0, single buffered']
    #allocation3 [shape = 's32[1]{0}', space=sflag, size = 0x4, scoped, tag = 'scoped memory for tpu_custom_call.1']
    %7 = vsyncpa [#allocation3], 0
    // Predicated region
    $region2: #{tpu_custom_call.1} parent=1 // pred_check
      _
    $region3: #{tpu_custom_call.1} parent=1 // pred_check_branch
      %9 = sbr.rel (0) target = $region5
    $region4: #{tpu_custom_call.1} parent=1 // pred_region
      _
    $region5: #{tpu_custom_call.1} parent=1 // pred_fallthru
      _
    // Predicated region
    $region6: #{tpu_custom_call.1} parent=1 // pred_check
      _
    $region7: #{tpu_custom_call.1} parent=1 // pred_check_branch
      %11 = sbr.rel (0) target = $region9
    $region8: #{tpu_custom_call.1} parent=1 // pred_region
      _
    $region9: #{tpu_custom_call.1} parent=1 // pred_fallthru
      _
    %v12 = vld [vmem:[%s0] sm:$0xff]
    %v13 = vld [vmem:[%s0 + $0x8] sm:$0xff]
    %v14 = vld [vmem:[%s1] sm:$0xff]
    %v15 = vld [vmem:[%s1 + $0x8] sm:$0xff]
    %v16 = vld [vmem:[%s1 + $0x10] sm:$0xff]
    %v17 = vld [vmem:[%s1 + $0x18] sm:$0xff]
    %vm18 = vcmask 261120
    %v20 = vsel %vm18, %v12, 0
    %v23 = vsel %vm18, %v13, 0
    %25 = vmatprep.subr.mxu0 0.0
    %26 = vmatpush1.msra.mxu0 %v14
    %27 = vmatprep.subr.mxu0 0.0
    %28 = vmatpush1.msra.mxu0 %v15
    %29 = vmatprep.subr.mxu0 0.0
    %30 = vmatpush1.msra.mxu0 %v16
    %31 = vmatprep.subr.mxu0 0.0
    %32 = vmatpush1.msra.mxu0 %v17
    %33 = vmatprep.subr.mxu0 0.0
    %34 = vmatpush1.msra.mxu0 0.0
    %35 = vmatprep.subr.mxu0 0.0
    %36 = vmatpush1.msra.mxu0 0.0
    %37 = vmatprep.subr.mxu0 0.0
    %38 = vmatpush1.msra.mxu0 0.0
    %39 = vmatprep.subr.mxu0 0.0
    %40 = vmatpush1.msra.mxu0 0.0
    %41 = vmatprep.subr.mxu0 0.0
    %42 = vmatpush1.msra.mxu0 0.0
    %43 = vmatprep.subr.mxu0 0.0
    %44 = vmatpush1.msra.mxu0 0.0
    %45 = vmatprep.subr.mxu0 0.0
    %46 = vmatpush1.msra.mxu0 0.0
    %47 = vmatprep.subr.mxu0 0.0
    %48 = vmatpush1.msra.mxu0 0.0
    %49 = vmatprep.subr.mxu0 0.0
    %50 = vmatpush1.msra.mxu0 0.0
    %51 = vmatprep.subr.mxu0 0.0
    %52 = vmatpush1.msra.mxu0 0.0
    %53 = vmatprep.subr.mxu0 0.0
    %54 = vmatpush1.msra.mxu0 0.0
    %55 = vmatprep.subr.mxu0 0.0
    %56 = vmatpush1.msra.mxu0 0.0
    %57 = vmatprep.subr.mxu0 0.0
    %58 = vmatpush1.msra.mxu0 0.0
    %59 = vmatprep.subr.mxu0 0.0
    %60 = vmatpush1.msra.mxu0 0.0
    %61 = vmatprep.subr.mxu0 0.0
    %62 = vmatpush1.msra.mxu0 0.0
    %63 = vmatprep.subr.mxu0 0.0
    %64 = vmatpush1.msra.mxu0 0.0
    %65 = vmatprep.subr.mxu0 0.0
    %66 = vmatpush1.msra.mxu0 0.0
    %67 = vmatprep.subr.mxu0 0.0
    %68 = vmatpush1.msra.mxu0 0.0
    %69 = vmatprep.subr.mxu0 0.0
    %70 = vmatpush1.msra.mxu0 0.0
    %71 = vmatprep.subr.mxu0 0.0
    %72 = vmatpush1.msra.mxu0 0.0
    %73 = vmatprep.subr.mxu0 0.0
    %74 = vmatpush1.msra.mxu0 0.0
    %75 = vmatprep.subr.mxu0 0.0
    %76 = vmatpush1.msra.mxu0 0.0
    %77 = vmatprep.subr.mxu0 0.0
    %78 = vmatpush1.msra.mxu0 0.0
    %79 = vmatprep.subr.mxu0 0.0
    %80 = vmatpush1.msra.mxu0 0.0
    %81 = vmatprep.subr.mxu0 0.0
    %82 = vmatpush1.msra.mxu0 0.0
    %83 = vmatprep.subr.mxu0 0.0
    %84 = vmatpush1.msra.mxu0 0.0
    %85 = vmatprep.subr.mxu0 0.0
    %86 = vmatpush1.msra.mxu0 0.0
    %87 = vmatprep.subr.mxu0 0.0
    %88 = vmatpush1.msra.mxu0 0.0
    %89 = vmatprep.mubr.f32.mxu0 0.0
    %90 = vmatmul.mubr.f32.gmra.mrb[0].mxu0 %v20
    %v91 = vpop.f32.mrb[0].mxu0
    %v92 = vadd.f32 0.0, %v91
    %v93 = vpop.f32.mrb[0].mxu0
    %94 = vmatprep.mubr.f32.mxu0 0.0
    %95 = vmatmul.mubr.f32.gmra.mrb[0].mxu0 %v23
    %v96 = vpop.f32.mrb[0].mxu0
    %v97 = vadd.f32 0.0, %v96
    %v98 = vpop.f32.mrb[0].mxu0
    %99 = vdwg.mxu0
    %vm100 = vcmask 130048
    %v101 = vsel %vm100, %v92, 0.0
    %102 = vadd.xlane.f32.xlu0 %v101
    %v103 = vpop.xlane.xlu0 %102
    %v104 = vsel %vm100, %v97, 0.0
    %105 = vadd.xlane.f32.xlu0 %v104
    %v106 = vpop.xlane.xlu0 %105
    %v107 = vmul.f32 %v103, 0.0625
    %v108 = vmul.f32 %v106, 0.0625
    %v109 = vsub.f32 %v92, %v107
    %v110 = vsub.f32 %v97, %v108
    %v111 = vmul.f32 %v109, %v109
    %v112 = vmul.f32 %v110, %v110
    %v113 = vsel %vm100, %v111, 0.0
    %114 = vadd.xlane.f32.xlu0 %v113
    %v115 = vpop.xlane.xlu0 %114
    %v116 = vsel %vm100, %v112, 0.0
    %117 = vadd.xlane.f32.xlu0 %v116
    %v118 = vpop.xlane.xlu0 %117
    %v119 = vadd.f32 %v115, 1e-12
    %v120 = vadd.f32 %v118, 1e-12
    %v121 = vrsqrt.pop %v119
    %v122 = vrsqrt.pop %v120
    %v123 = vmul.f32 %v109, %v121
    %v124 = vmul.f32 %v110, %v122
    %125 = vst.msk [vmem:[#allocation2] sm:$0xff] %vm100, %v123
    %126 = vst.msk [vmem:[#allocation2 + $0x8] sm:$0xff] %vm100, %v124
    // Predicated region
    $region10: #{tpu_custom_call.1} parent=1 // pred_check
      _
    $region11: #{tpu_custom_call.1} parent=1 // pred_check_branch
      %128 = sbr.rel (0) target = $region13
    $region12: #{tpu_custom_call.1} parent=1 // pred_region
      %s130 = ssub.s32 256, 256
      %131 = vsyncadd [#allocation3], %s130
      %s132 = sshll.u32 [#allocation2], 4
      %s133 = int_to_ptr.vmem [resolvable:$true] %s132
      %138 = dma.vmem_to_hbm [thread:$0]  %s133, 256, %s2, [#allocation3], 128, 128, 8
    $region13: #{tpu_custom_call.1} parent=1 // pred_fallthru
      _
    // Predicated region
    $region14: #{tpu_custom_call.1} parent=1 // pred_check
      _
    $region15: #{tpu_custom_call.1} parent=1 // pred_check_branch
      %140 = sbr.rel (0) target = $region17
    $region16: #{tpu_custom_call.1} parent=1 // pred_region
      %141 = dma.done [#allocation3], 256
    $region17: #{tpu_custom_call.1} parent=1 // pred_fallthru
      _
    %142 = vsyncpa [#allocation3], 1

</llo_original>
